<compile_context>
chip_gen: v7x
topology: tpu7x:2x2x1
jax: 0.10.0
libtpu: 0.0.40
codegen_flags: <defaults>
</compile_context>

<pallas_src>
import functools

import jax
import jax.numpy as jnp
from jax.experimental import pallas as pl
from jax.experimental.pallas import tpu as pltpu


BN_EPS = 1e-5
HIDDEN = 128


def actor_kernel(x_ref, vec_ref, w_ref, o_ref, *, sp, hidden):
    """One grid step = GBLK independent batches (groups) folded together.

    x_ref   : (GBLK, B, SP)  states, lane-padded to SP (zeros beyond state_size)
    vec_ref : (12, SP)       packed [g1,be1,b1, g2,be2,b2, g3,be3,b3, g4,be4,b4]
    w_ref   : (SP+3H, H)     [fc1 (rows zero-padded); fc2; fc3; fc4 (cols zero-padded)]
    o_ref   : (GBLK, B, H)   lane-dense output; real actions in [..., :action_size]
    """
    SP, H = sp, hidden
    GBLK, B, _ = x_ref.shape

    def bn(h3, gamma, beta):
        # Training-mode BatchNorm1d; stats per group over the batch axis (axis=1).
        # Two-pass (centered) variance == biased E[(x-mu)^2]; avoids cancellation.
        mu = jnp.mean(h3, axis=1, keepdims=True)
        d = h3 - mu
        var = jnp.mean(d * d, axis=1, keepdims=True)
        s = gamma * jax.lax.rsqrt(var + BN_EPS)          # (1, W) broadcast
        return d * s + beta                              # padded lanes stay exactly 0

    def dense(h3, w_rows, b_row, width):
        # Flatten groups into the matmul M dimension (no-copy when B % 8 == 0).
        h2 = h3.reshape(GBLK * B, width)
        y = jnp.dot(h2, w_rows, preferred_element_type=jnp.float32) + b_row
        return y.reshape(GBLK, B, H)

    x = x_ref[...]

    # layer 1: bn1 -> fc1 -> relu   (padded state lanes stay 0 through bn; fc1 rows padded 0)
    h = bn(x, vec_ref[0:1, :SP], vec_ref[1:2, :SP])
    h = jnp.maximum(dense(h, w_ref[0:SP, :], vec_ref[2:3, :H], SP), 0.0)

    # layer 2: bn2 -> fc2 -> relu
    h = bn(h, vec_ref[3:4, :H], vec_ref[4:5, :H])
    h = jnp.maximum(dense(h, w_ref[SP:SP + H, :], vec_ref[5:6, :H], H), 0.0)

    # layer 3: bn3 -> fc3 -> relu
    h = bn(h, vec_ref[6:7, :H], vec_ref[7:8, :H])
    h = jnp.maximum(dense(h, w_ref[SP + H:SP + 2 * H, :], vec_ref[8:9, :H], H), 0.0)

    # head: bn4 -> fc4 (cols zero-padded to H) -> tanh   (padded cols give tanh(0)=0)
    h = bn(h, vec_ref[9:10, :H], vec_ref[10:11, :H])
    h = dense(h, w_ref[SP + 2 * H:SP + 3 * H, :], vec_ref[11:12, :H], H)
    o_ref[...] = jnp.tanh(h)


@functools.partial(jax.jit, static_argnames=("action_size",))
def actor_forward(state, vecs, wbig, action_size):
    """state: (B, S) or (G, B, S) for G independent env batches."""
    squeeze = state.ndim == 2
    if squeeze:
        state = state[None]
    G, B, S = state.shape
    H = HIDDEN
    SP = wbig.shape[0] - 3 * H
    assert wbig.shape[1] == H and vecs.shape == (12, SP) and S <= SP

    # Lane-pad the state to SP so layer 1 is a uniform 128-wide lane-dense op.
    if S < SP:
        state = jnp.pad(state, ((0, 0), (0, 0), (0, SP - S)))

    # Grid sizing: 2 parallel steps (one per TensorCore on v7x) when G splits
    # evenly, otherwise a single step.  On single-TC chips (v5e/v6e) the grid
    # is a serial loop, so the second step only costs ~0.35 us — negligible —
    # and the real win comes from folding GBLK groups per step.
    steps = 2 if (G >= 2 and G % 2 == 0) else 1
    gblk = G // steps

    flops = 2 * G * B * H * (SP + 3 * H)
    transcendentals = G * B * H + G * (SP + 3 * H)       # tanh + per-feature rsqrt
    bytes_accessed = 4 * (state.size + vecs.size + wbig.size + G * B * H)

    kernel = functools.partial(actor_kernel, sp=SP, hidden=H)

    out = pl.pallas_call(
        kernel,
        out_shape=jax.ShapeDtypeStruct((G, B, H), jnp.float32),
        grid=(steps,),
        in_specs=[
            pl.BlockSpec((gblk, B, SP), lambda g: (g, 0, 0)),   # per-step group block
            pl.BlockSpec(vecs.shape, lambda g: (0, 0)),         # shared, fetched once
            pl.BlockSpec(wbig.shape, lambda g: (0, 0)),         # shared, fetched once
        ],
        out_specs=pl.BlockSpec((gblk, B, H), lambda g: (g, 0, 0)),
        compiler_params=pltpu.CompilerParams(
            dimension_semantics=("parallel",)),                 # shards the 2 steps across TCs (v7x)
        cost_estimate=pl.CostEstimate(
            flops=flops,
            transcendentals=transcendentals,
            bytes_accessed=bytes_accessed),
    )(state, vecs, wbig)

    out = out[..., :action_size]                                # drop lane padding
    if squeeze:
        out = out[0]
    return out


def init_params(key, state_size, action_size, hidden=HIDDEN):
    """Mirror the module's reset_parameters():
    fc1-3 weights ~ U(-1/sqrt(out), 1/sqrt(out)) (hidden_init uses size()[0]),
    fc4 weights ~ U(-3e-3, 3e-3); biases keep PyTorch Linear default
    U(-1/sqrt(fan_in), 1/sqrt(fan_in)); BN gamma=1, beta=0."""
    dims = [(state_size, hidden), (hidden, hidden), (hidden, hidden),
            (hidden, action_size)]
    params = []
    for li, (fan_in, fan_out) in enumerate(dims):
        key, kw, kb = jax.random.split(key, 3)
        wlim = (1.0 / float(fan_out) ** 0.5) if li < 3 else 3e-3
        blim = 1.0 / float(fan_in) ** 0.5
        w = jax.random.uniform(kw, (fan_in, fan_out), jnp.float32, -wlim, wlim)
        b = jax.random.uniform(kb, (fan_out,), jnp.float32, -blim, blim)
        gamma = jnp.ones((fan_in,), jnp.float32)
        beta = jnp.zeros((fan_in,), jnp.float32)
        params.append((gamma, beta, w, b))
    return params


def pack_params(params, state_size, action_size, hidden=HIDDEN):
    """Pack per-layer vectors into one (12, SP) slab and all four weights into
    one (SP+3H, H) slab.  fc1 is row-padded from state_size to SP; fc4 output
    columns are zero-padded to H for a lane-dense store."""
    assert hidden % 128 == 0 and action_size <= hidden
    SP = max(hidden, 128 * (-(-state_size // 128)))     # padded state lanes (>= H)

    (g1, be1, w1, b1), (g2, be2, w2, b2), (g3, be3, w3, b3), (g4, be4, w4, b4) = params

    def row(v, width):
        return jnp.zeros((SP,), jnp.float32).at[:width].set(v.reshape(-1))

    vecs = jnp.stack([
        row(g1, state_size), row(be1, state_size), row(b1, hidden),
        row(g2, hidden), row(be2, hidden), row(b2, hidden),
        row(g3, hidden), row(be3, hidden), row(b3, hidden),
        row(g4, hidden), row(be4, hidden), row(b4, action_size),
    ], axis=0)                                                     # (12, SP)

    w1p = jnp.zeros((SP, hidden), jnp.float32).at[:state_size, :].set(w1)
    w4p = jnp.zeros((hidden, hidden), jnp.float32).at[:, :action_size].set(w4)
    wbig = jnp.concatenate([w1p, w2, w3, w4p], axis=0)             # (SP+3H, H)
    return vecs, wbig


def reference_forward(state, params):
    """Pure-JAX reference for one batch (training-mode BN)."""
    x = state.astype(jnp.float32)
    for i, (g, be, w, b) in enumerate(params):
        mu = jnp.mean(x, axis=0, keepdims=True)
        var = jnp.mean((x - mu) ** 2, axis=0, keepdims=True)
        x = (x - mu) * jax.lax.rsqrt(var + BN_EPS) * g + be
        x = x @ w + b
        x = jnp.maximum(x, 0.0) if i < 3 else jnp.tanh(x)
    return x


# TODO(synk): BatchNorm running_mean / running_var buffer updates (train-time
# bookkeeping) are not emitted; only the forward normalization is implemented.
# Note: PyTorch BatchNorm1d raises for batch size 1 in training mode; this
# kernel instead degenerates to rsqrt(eps) scaling for B=1.

if __name__ == "__main__":
    GROUPS = 4          # folded 2-per-step into a 2-step "parallel" grid (both TCs on v7x)
    BATCH = 8           # multiple of 8 -> no-copy (GBLK, B, H) <-> (GBLK*B, H) reshapes
    STATE_SIZE = 32
    ACTION_SIZE = 8

    key = jax.random.PRNGKey(0)
    key, kx = jax.random.split(key)
    state = jax.random.normal(kx, (GROUPS, BATCH, STATE_SIZE), jnp.float32)

    params = init_params(key, STATE_SIZE, ACTION_SIZE)
    vecs, wbig = pack_params(params, STATE_SIZE, ACTION_SIZE)

    # grouped (gridded) path
    out = actor_forward(state, vecs, wbig, action_size=ACTION_SIZE)
    out = jax.block_until_ready(out)
    assert out.shape == (GROUPS, BATCH, ACTION_SIZE)

    ref = jnp.stack([reference_forward(state[g], params) for g in range(GROUPS)])
    assert jnp.allclose(out, ref, atol=1e-4, rtol=1e-4), "mismatch vs JAX reference (grouped)"

    # plain single-batch (2-D) path
    out2 = actor_forward(state[0], vecs, wbig, action_size=ACTION_SIZE)
    out2 = jax.block_until_ready(out2)
    assert out2.shape == (BATCH, ACTION_SIZE)
    assert jnp.allclose(out2, ref[0], atol=1e-4, rtol=1e-4), "mismatch vs JAX reference (2-D)"

    print("KERNEL_OK")
</pallas_src>

<mosaic_0001>
module attributes {stable_mosaic.version = 11 : i64} {
  func.func @actor_kernel(%arg0: i32, %arg1: memref<2x8x128xf32, #tpu.memory_space<vmem>>, %arg2: memref<12x128xf32, #tpu.memory_space<vmem>>, %arg3: memref<512x128xf32, #tpu.memory_space<vmem>>, %arg4: memref<2x8x128xf32, #tpu.memory_space<vmem>>) attributes {dimension_semantics = [#tpu.dimension_semantics<parallel>], iteration_bounds = array<i64: 2>, scalar_prefetch = 0 : i64, scratch_operands = 0 : i64, tpu.core_type = #tpu.core_type<tc>, window_params = [{transform_indices = @transform_0, window_bounds = array<i64: 2, 8, 128>}, {pipeline_mode = #tpu.pipeline_mode<synchronous>, transform_indices = @transform_1, window_bounds = array<i64: 12, 128>}, {pipeline_mode = #tpu.pipeline_mode<synchronous>, transform_indices = @transform_2, window_bounds = array<i64: 512, 128>}, {transform_indices = @transform_3, window_bounds = array<i64: 2, 8, 128>}]} {
    %c0 = arith.constant 0 : index
    %c0_0 = arith.constant 0 : index
    %c0_1 = arith.constant 0 : index
    %0 = vector.load %arg1[%c0, %c0_0, %c0_1] : memref<2x8x128xf32, #tpu.memory_space<vmem>>, vector<2x8x128xf32>
    %c0_2 = arith.constant 0 : index
    %c0_3 = arith.constant 0 : index
    %1 = vector.load %arg2[%c0_2, %c0_3] : memref<12x128xf32, #tpu.memory_space<vmem>>, vector<1x128xf32>
    %c1 = arith.constant 1 : index
    %c0_4 = arith.constant 0 : index
    %2 = vector.load %arg2[%c1, %c0_4] : memref<12x128xf32, #tpu.memory_space<vmem>>, vector<1x128xf32>
    %cst = arith.constant dense<0.000000e+00> : vector<2x128xf32>
    %3 = vector.multi_reduction <add>, %0, %cst [1] : vector<2x8x128xf32> to vector<2x128xf32>
    %4 = vector.shape_cast %3 : vector<2x128xf32> to vector<2x1x128xf32>
    %cst_5 = arith.constant 8.000000e+00 : f32
    %5 = vector.broadcast %cst_5 : f32 to vector<2x1x128xf32>
    %6 = arith.divf %4, %5 : vector<2x1x128xf32>
    %7 = vector.broadcast %6 : vector<2x1x128xf32> to vector<2x8x128xf32>
    %8 = arith.subf %0, %7 : vector<2x8x128xf32>
    %9 = arith.mulf %8, %8 : vector<2x8x128xf32>
    %cst_6 = arith.constant dense<0.000000e+00> : vector<2x128xf32>
    %10 = vector.multi_reduction <add>, %9, %cst_6 [1] : vector<2x8x128xf32> to vector<2x128xf32>
    %11 = vector.shape_cast %10 : vector<2x128xf32> to vector<2x1x128xf32>
    %cst_7 = arith.constant 8.000000e+00 : f32
    %12 = vector.broadcast %cst_7 : f32 to vector<2x1x128xf32>
    %13 = arith.divf %11, %12 : vector<2x1x128xf32>
    %cst_8 = arith.constant 9.99999974E-6 : f32
    %14 = vector.broadcast %cst_8 : f32 to vector<2x1x128xf32>
    %15 = arith.addf %13, %14 : vector<2x1x128xf32>
    %16 = math.rsqrt %15 : vector<2x1x128xf32>
    %17 = vector.shape_cast %1 : vector<1x128xf32> to vector<1x1x128xf32>
    %18 = vector.broadcast %17 : vector<1x1x128xf32> to vector<2x1x128xf32>
    %19 = arith.mulf %18, %16 : vector<2x1x128xf32>
    %20 = vector.broadcast %19 : vector<2x1x128xf32> to vector<2x8x128xf32>
    %21 = arith.mulf %8, %20 : vector<2x8x128xf32>
    %22 = vector.shape_cast %2 : vector<1x128xf32> to vector<1x1x128xf32>
    %23 = vector.broadcast %22 : vector<1x1x128xf32> to vector<2x8x128xf32>
    %24 = arith.addf %21, %23 : vector<2x8x128xf32>
    %c0_9 = arith.constant 0 : index
    %c0_10 = arith.constant 0 : index
    %25 = vector.load %arg3[%c0_9, %c0_10] : memref<512x128xf32, #tpu.memory_space<vmem>>, vector<128x128xf32>
    %c2 = arith.constant 2 : index
    %c0_11 = arith.constant 0 : index
    %26 = vector.load %arg2[%c2, %c0_11] : memref<12x128xf32, #tpu.memory_space<vmem>>, vector<1x128xf32>
    %27 = vector.shape_cast %24 : vector<2x8x128xf32> to vector<16x128xf32>
    %cst_12 = arith.constant dense<0.000000e+00> : vector<16x128xf32>
    %28 = tpu.matmul %27, %25, %cst_12 {dimension_numbers = #tpu.dot_dimension_numbers<[1], [0], [0], [1], [0, 0, 1, 1], [], []>} : vector<16x128xf32>, vector<128x128xf32>, vector<16x128xf32> -> vector<16x128xf32>
    %29 = vector.broadcast %26 : vector<1x128xf32> to vector<16x128xf32>
    %30 = arith.addf %28, %29 : vector<16x128xf32>
    %31 = vector.shape_cast %30 : vector<16x128xf32> to vector<2x8x128xf32>
    %cst_13 = arith.constant 0.000000e+00 : f32
    %32 = vector.broadcast %cst_13 : f32 to vector<2x8x128xf32>
    %33 = arith.maximumf %31, %32 : vector<2x8x128xf32>
    %c3 = arith.constant 3 : index
    %c0_14 = arith.constant 0 : index
    %34 = vector.load %arg2[%c3, %c0_14] : memref<12x128xf32, #tpu.memory_space<vmem>>, vector<1x128xf32>
    %c4 = arith.constant 4 : index
    %c0_15 = arith.constant 0 : index
    %35 = vector.load %arg2[%c4, %c0_15] : memref<12x128xf32, #tpu.memory_space<vmem>>, vector<1x128xf32>
    %cst_16 = arith.constant dense<0.000000e+00> : vector<2x128xf32>
    %36 = vector.multi_reduction <add>, %33, %cst_16 [1] : vector<2x8x128xf32> to vector<2x128xf32>
    %37 = vector.shape_cast %36 : vector<2x128xf32> to vector<2x1x128xf32>
    %cst_17 = arith.constant 8.000000e+00 : f32
    %38 = vector.broadcast %cst_17 : f32 to vector<2x1x128xf32>
    %39 = arith.divf %37, %38 : vector<2x1x128xf32>
    %40 = vector.broadcast %39 : vector<2x1x128xf32> to vector<2x8x128xf32>
    %41 = arith.subf %33, %40 : vector<2x8x128xf32>
    %42 = arith.mulf %41, %41 : vector<2x8x128xf32>
    %cst_18 = arith.constant dense<0.000000e+00> : vector<2x128xf32>
    %43 = vector.multi_reduction <add>, %42, %cst_18 [1] : vector<2x8x128xf32> to vector<2x128xf32>
    %44 = vector.shape_cast %43 : vector<2x128xf32> to vector<2x1x128xf32>
    %cst_19 = arith.constant 8.000000e+00 : f32
    %45 = vector.broadcast %cst_19 : f32 to vector<2x1x128xf32>
    %46 = arith.divf %44, %45 : vector<2x1x128xf32>
    %cst_20 = arith.constant 9.99999974E-6 : f32
    %47 = vector.broadcast %cst_20 : f32 to vector<2x1x128xf32>
    %48 = arith.addf %46, %47 : vector<2x1x128xf32>
    %49 = math.rsqrt %48 : vector<2x1x128xf32>
    %50 = vector.shape_cast %34 : vector<1x128xf32> to vector<1x1x128xf32>
    %51 = vector.broadcast %50 : vector<1x1x128xf32> to vector<2x1x128xf32>
    %52 = arith.mulf %51, %49 : vector<2x1x128xf32>
    %53 = vector.broadcast %52 : vector<2x1x128xf32> to vector<2x8x128xf32>
    %54 = arith.mulf %41, %53 : vector<2x8x128xf32>
    %55 = vector.shape_cast %35 : vector<1x128xf32> to vector<1x1x128xf32>
    %56 = vector.broadcast %55 : vector<1x1x128xf32> to vector<2x8x128xf32>
    %57 = arith.addf %54, %56 : vector<2x8x128xf32>
    %c128 = arith.constant 128 : index
    %c0_21 = arith.constant 0 : index
    %58 = vector.load %arg3[%c128, %c0_21] : memref<512x128xf32, #tpu.memory_space<vmem>>, vector<128x128xf32>
    %c5 = arith.constant 5 : index
    %c0_22 = arith.constant 0 : index
    %59 = vector.load %arg2[%c5, %c0_22] : memref<12x128xf32, #tpu.memory_space<vmem>>, vector<1x128xf32>
    %60 = vector.shape_cast %57 : vector<2x8x128xf32> to vector<16x128xf32>
    %cst_23 = arith.constant dense<0.000000e+00> : vector<16x128xf32>
    %61 = tpu.matmul %60, %58, %cst_23 {dimension_numbers = #tpu.dot_dimension_numbers<[1], [0], [0], [1], [0, 0, 1, 1], [], []>} : vector<16x128xf32>, vector<128x128xf32>, vector<16x128xf32> -> vector<16x128xf32>
    %62 = vector.broadcast %59 : vector<1x128xf32> to vector<16x128xf32>
    %63 = arith.addf %61, %62 : vector<16x128xf32>
    %64 = vector.shape_cast %63 : vector<16x128xf32> to vector<2x8x128xf32>
    %cst_24 = arith.constant 0.000000e+00 : f32
    %65 = vector.broadcast %cst_24 : f32 to vector<2x8x128xf32>
    %66 = arith.maximumf %64, %65 : vector<2x8x128xf32>
    %c6 = arith.constant 6 : index
    %c0_25 = arith.constant 0 : index
    %67 = vector.load %arg2[%c6, %c0_25] : memref<12x128xf32, #tpu.memory_space<vmem>>, vector<1x128xf32>
    %c7 = arith.constant 7 : index
    %c0_26 = arith.constant 0 : index
    %68 = vector.load %arg2[%c7, %c0_26] : memref<12x128xf32, #tpu.memory_space<vmem>>, vector<1x128xf32>
    %cst_27 = arith.constant dense<0.000000e+00> : vector<2x128xf32>
    %69 = vector.multi_reduction <add>, %66, %cst_27 [1] : vector<2x8x128xf32> to vector<2x128xf32>
    %70 = vector.shape_cast %69 : vector<2x128xf32> to vector<2x1x128xf32>
    %cst_28 = arith.constant 8.000000e+00 : f32
    %71 = vector.broadcast %cst_28 : f32 to vector<2x1x128xf32>
    %72 = arith.divf %70, %71 : vector<2x1x128xf32>
    %73 = vector.broadcast %72 : vector<2x1x128xf32> to vector<2x8x128xf32>
    %74 = arith.subf %66, %73 : vector<2x8x128xf32>
    %75 = arith.mulf %74, %74 : vector<2x8x128xf32>
    %cst_29 = arith.constant dense<0.000000e+00> : vector<2x128xf32>
    %76 = vector.multi_reduction <add>, %75, %cst_29 [1] : vector<2x8x128xf32> to vector<2x128xf32>
    %77 = vector.shape_cast %76 : vector<2x128xf32> to vector<2x1x128xf32>
    %cst_30 = arith.constant 8.000000e+00 : f32
    %78 = vector.broadcast %cst_30 : f32 to vector<2x1x128xf32>
    %79 = arith.divf %77, %78 : vector<2x1x128xf32>
    %cst_31 = arith.constant 9.99999974E-6 : f32
    %80 = vector.broadcast %cst_31 : f32 to vector<2x1x128xf32>
    %81 = arith.addf %79, %80 : vector<2x1x128xf32>
    %82 = math.rsqrt %81 : vector<2x1x128xf32>
    %83 = vector.shape_cast %67 : vector<1x128xf32> to vector<1x1x128xf32>
    %84 = vector.broadcast %83 : vector<1x1x128xf32> to vector<2x1x128xf32>
    %85 = arith.mulf %84, %82 : vector<2x1x128xf32>
    %86 = vector.broadcast %85 : vector<2x1x128xf32> to vector<2x8x128xf32>
    %87 = arith.mulf %74, %86 : vector<2x8x128xf32>
    %88 = vector.shape_cast %68 : vector<1x128xf32> to vector<1x1x128xf32>
    %89 = vector.broadcast %88 : vector<1x1x128xf32> to vector<2x8x128xf32>
    %90 = arith.addf %87, %89 : vector<2x8x128xf32>
    %c256 = arith.constant 256 : index
    %c0_32 = arith.constant 0 : index
    %91 = vector.load %arg3[%c256, %c0_32] : memref<512x128xf32, #tpu.memory_space<vmem>>, vector<128x128xf32>
    %c8 = arith.constant 8 : index
    %c0_33 = arith.constant 0 : index
    %92 = vector.load %arg2[%c8, %c0_33] : memref<12x128xf32, #tpu.memory_space<vmem>>, vector<1x128xf32>
    %93 = vector.shape_cast %90 : vector<2x8x128xf32> to vector<16x128xf32>
    %cst_34 = arith.constant dense<0.000000e+00> : vector<16x128xf32>
    %94 = tpu.matmul %93, %91, %cst_34 {dimension_numbers = #tpu.dot_dimension_numbers<[1], [0], [0], [1], [0, 0, 1, 1], [], []>} : vector<16x128xf32>, vector<128x128xf32>, vector<16x128xf32> -> vector<16x128xf32>
    %95 = vector.broadcast %92 : vector<1x128xf32> to vector<16x128xf32>
    %96 = arith.addf %94, %95 : vector<16x128xf32>
    %97 = vector.shape_cast %96 : vector<16x128xf32> to vector<2x8x128xf32>
    %cst_35 = arith.constant 0.000000e+00 : f32
    %98 = vector.broadcast %cst_35 : f32 to vector<2x8x128xf32>
    %99 = arith.maximumf %97, %98 : vector<2x8x128xf32>
    %c9 = arith.constant 9 : index
    %c0_36 = arith.constant 0 : index
    %100 = vector.load %arg2[%c9, %c0_36] : memref<12x128xf32, #tpu.memory_space<vmem>>, vector<1x128xf32>
    %c10 = arith.constant 10 : index
    %c0_37 = arith.constant 0 : index
    %101 = vector.load %arg2[%c10, %c0_37] : memref<12x128xf32, #tpu.memory_space<vmem>>, vector<1x128xf32>
    %cst_38 = arith.constant dense<0.000000e+00> : vector<2x128xf32>
    %102 = vector.multi_reduction <add>, %99, %cst_38 [1] : vector<2x8x128xf32> to vector<2x128xf32>
    %103 = vector.shape_cast %102 : vector<2x128xf32> to vector<2x1x128xf32>
    %cst_39 = arith.constant 8.000000e+00 : f32
    %104 = vector.broadcast %cst_39 : f32 to vector<2x1x128xf32>
    %105 = arith.divf %103, %104 : vector<2x1x128xf32>
    %106 = vector.broadcast %105 : vector<2x1x128xf32> to vector<2x8x128xf32>
    %107 = arith.subf %99, %106 : vector<2x8x128xf32>
    %108 = arith.mulf %107, %107 : vector<2x8x128xf32>
    %cst_40 = arith.constant dense<0.000000e+00> : vector<2x128xf32>
    %109 = vector.multi_reduction <add>, %108, %cst_40 [1] : vector<2x8x128xf32> to vector<2x128xf32>
    %110 = vector.shape_cast %109 : vector<2x128xf32> to vector<2x1x128xf32>
    %cst_41 = arith.constant 8.000000e+00 : f32
    %111 = vector.broadcast %cst_41 : f32 to vector<2x1x128xf32>
    %112 = arith.divf %110, %111 : vector<2x1x128xf32>
    %cst_42 = arith.constant 9.99999974E-6 : f32
    %113 = vector.broadcast %cst_42 : f32 to vector<2x1x128xf32>
    %114 = arith.addf %112, %113 : vector<2x1x128xf32>
    %115 = math.rsqrt %114 : vector<2x1x128xf32>
    %116 = vector.shape_cast %100 : vector<1x128xf32> to vector<1x1x128xf32>
    %117 = vector.broadcast %116 : vector<1x1x128xf32> to vector<2x1x128xf32>
    %118 = arith.mulf %117, %115 : vector<2x1x128xf32>
    %119 = vector.broadcast %118 : vector<2x1x128xf32> to vector<2x8x128xf32>
    %120 = arith.mulf %107, %119 : vector<2x8x128xf32>
    %121 = vector.shape_cast %101 : vector<1x128xf32> to vector<1x1x128xf32>
    %122 = vector.broadcast %121 : vector<1x1x128xf32> to vector<2x8x128xf32>
    %123 = arith.addf %120, %122 : vector<2x8x128xf32>
    %c384 = arith.constant 384 : index
    %c0_43 = arith.constant 0 : index
    %124 = vector.load %arg3[%c384, %c0_43] : memref<512x128xf32, #tpu.memory_space<vmem>>, vector<128x128xf32>
    %c11 = arith.constant 11 : index
    %c0_44 = arith.constant 0 : index
    %125 = vector.load %arg2[%c11, %c0_44] : memref<12x128xf32, #tpu.memory_space<vmem>>, vector<1x128xf32>
    %126 = vector.shape_cast %123 : vector<2x8x128xf32> to vector<16x128xf32>
    %cst_45 = arith.constant dense<0.000000e+00> : vector<16x128xf32>
    %127 = tpu.matmul %126, %124, %cst_45 {dimension_numbers = #tpu.dot_dimension_numbers<[1], [0], [0], [1], [0, 0, 1, 1], [], []>} : vector<16x128xf32>, vector<128x128xf32>, vector<16x128xf32> -> vector<16x128xf32>
    %128 = vector.broadcast %125 : vector<1x128xf32> to vector<16x128xf32>
    %129 = arith.addf %127, %128 : vector<16x128xf32>
    %130 = vector.shape_cast %129 : vector<16x128xf32> to vector<2x8x128xf32>
    %131 = math.tanh %130 : vector<2x8x128xf32>
    %c0_46 = arith.constant 0 : index
    %c0_47 = arith.constant 0 : index
    %c0_48 = arith.constant 0 : index
    %132 = vector.load %arg4[%c0_46, %c0_47, %c0_48] : memref<2x8x128xf32, #tpu.memory_space<vmem>>, vector<2x8x128xf32>
    tpu.vector_store %arg4[%c0_46, %c0_47, %c0_48], %131 {strides = array<i32>} : memref<2x8x128xf32, #tpu.memory_space<vmem>>, vector<2x8x128xf32>,
    return
  }
  func.func @transform_0(%arg0: i32) -> (i32, i32, i32) {
    %c0_i32 = arith.constant 0 : i32
    %c0_i32_0 = arith.constant 0 : i32
    %c0_i32_1 = arith.constant 0 : i32
    return %arg0, %c0_i32, %c0_i32_0 : i32, i32, i32
  }
  func.func @transform_1(%arg0: i32) -> (i32, i32) {
    %c0_i32 = arith.constant 0 : i32
    %c0_i32_0 = arith.constant 0 : i32
    %c0_i32_1 = arith.constant 0 : i32
    return %c0_i32, %c0_i32_0 : i32, i32
  }
  func.func @transform_2(%arg0: i32) -> (i32, i32) {
    %c0_i32 = arith.constant 0 : i32
    %c0_i32_0 = arith.constant 0 : i32
    %c0_i32_1 = arith.constant 0 : i32
    return %c0_i32, %c0_i32_0 : i32, i32
  }
  func.func @transform_3(%arg0: i32) -> (i32, i32, i32) {
    %c0_i32 = arith.constant 0 : i32
    %c0_i32_0 = arith.constant 0 : i32
    %c0_i32_1 = arith.constant 0 : i32
    return %arg0, %c0_i32, %c0_i32_0 : i32, i32, i32
  }
}

</mosaic_0001>

<llo_original>
// kernel: actor_forward.1
$region0: #{actor_forward.1}
  #allocation0 [shape = 'u32[]', space=smem, size = 0x4, offset = 0x4, fixed_abs, tag = 'smem constant byte address 0x4 - core index']
  #allocation1 [shape = 'u32[144,128]{1,0:T(1,128)}', space=vmem, size = 0x12000, scoped, tag = 'internal scratch']
  %s0 = inlined_call_operand.vmem [shape: f32[4,8,128], index: 0, kind: input, shape index: {}]
  %s1 = inlined_call_operand.vmem [shape: f32[12,128], index: 1, kind: input, shape index: {}]
  %s2 = inlined_call_operand.hbm [shape: f32[512,128], index: 2, kind: input, shape index: {}]
  %s3 = inlined_call_operand.hbm [shape: f32[4,8,128], index: 3, kind: output, shape index: {}]
  %s4 = sld [smem:[#allocation0]]
  $region49: #{actor_forward.1} parent=0
    _
  %s6 = ssub.s32 1, %s4
  %s7 = scalar_select 0, %s6, %s4
  $region1: #{actor_forward.1} parent=0
    #allocation2 [shape = 'u8[262144]{0}', space=vmem, size = 0x40000, scoped, tag = 'input window, operand 2, single buffered']
    #allocation3 [shape = 's32[2]{0}', space=sflag, size = 0x8, scoped, tag = 'scoped memory for actor_forward.1']
    #allocation4 [shape = 's32[2]{0}', space=sflag, size = 0x8, scoped, tag = 'scoped memory for actor_forward.1']
    #allocation5 [shape = 'u8[16384]{0}', space=vmem, size = 0x4000, scoped, tag = 'output window, operand 0']
    %8 = vsyncpa [#allocation3], 0
    %9 = vsyncpa [#allocation4], 0
    %s10 = scalar_lea.sflag [#allocation4], 1
    %11 = vsyncpa %s10, 0
    loop: start=0, step=1, limit=4
    $region2: #{actor_forward.1} parent=1 // loop_pre_header
      _
    $region3: #{actor_forward.1} parent=1 // loop_header
      %s13 = sphi 0, %s17
      %p14 = scmp.ge.s32.totalorder %s13, 4
      %s23 = sphi 0, %s25
      %s26 = sphi 0, %s23
      %s27 = sphi 0, %s26
      %s43 = sphi 0, %s27
      %s47 = sphi 0, %s47
      %s49 = sphi 0, %s47
      %s50 = sphi 0, %s49
      %s64 = sphi 0, %s50
      %s68 = sphi 0, %s68
      %s70 = sphi 0, %s68
      %s71 = sphi 0, %s70
      %s85 = sphi 0, %s71
      %s91 = sphi 0, %s93
      %s94 = sphi 0, %s91
      %s95 = sphi 0, %s94
      %s111 = sphi 0, %s95
    $region4: #{actor_forward.1} parent=1 // loop_header_branch
      %16 = sbr.rel (%p14) target = $region8
    $region5: #{actor_forward.1} parent=1 // loop_body
      %s18 = ssub.s32 %s13, 1
      %s19 = ssub.s32 %s13, 2
      %s20 = sadd.s32 %s13, 1
      %s21 = ssub.s32 %s13, %s20
      %p22 = scmp.eq.s32.totalorder %s21, 0
      %s24 = sadd.s32 %s23, 1
      %s25 = scalar_select %p22, %s23, %s24
      %p28 = pneg %p22
      %p29 = scmp.eq.s32.totalorder %s13, 1
      %p30 = por %p28, %p29
      %p31 = scmp.ne.s32.totalorder %s23, %s26
      %p32 = scmp.eq.s32.totalorder %s13, 0
      %p33 = por %p31, %p32
      %p34 = scmp.ne.s32.totalorder %s23, %s26
      %p35 = scmp.eq.s32.totalorder %s18, 1
      %p36 = por %p34, %p35
      %p37 = scmp.ne.s32.totalorder %s26, %s27
      %p38 = scmp.eq.s32.totalorder %s18, 0
      %p39 = por %p37, %p38
      %p40 = scmp.ne.s32.totalorder %s26, %s27
      %p41 = scmp.eq.s32.totalorder %s19, 1
      %p42 = por %p40, %p41
      %p44 = scmp.ne.s32.totalorder %s27, %s43
      %p45 = scmp.eq.s32.totalorder %s19, 0
      %p46 = por %p44, %p45
      %s48 = sadd.s32 %s47, 1
      %p51 = scmp.eq.s32.totalorder %s13, 1
      %p52 = scmp.ne.s32.totalorder %s47, %s49
      %p53 = scmp.eq.s32.totalorder %s13, 0
      %p54 = por %p52, %p53
      %p55 = scmp.ne.s32.totalorder %s47, %s49
      %p56 = scmp.eq.s32.totalorder %s18, 1
      %p57 = por %p55, %p56
      %p58 = scmp.ne.s32.totalorder %s49, %s50
      %p59 = scmp.eq.s32.totalorder %s18, 0
      %p60 = por %p58, %p59
      %p61 = scmp.ne.s32.totalorder %s49, %s50
      %p62 = scmp.eq.s32.totalorder %s19, 1
      %p63 = por %p61, %p62
      %p65 = scmp.ne.s32.totalorder %s50, %s64
      %p66 = scmp.eq.s32.totalorder %s19, 0
      %p67 = por %p65, %p66
      %s69 = sadd.s32 %s68, 1
      %p72 = scmp.eq.s32.totalorder %s13, 1
      %p73 = scmp.ne.s32.totalorder %s68, %s70
      %p74 = scmp.eq.s32.totalorder %s13, 0
      %p75 = por %p73, %p74
      %p76 = scmp.ne.s32.totalorder %s68, %s70
      %p77 = scmp.eq.s32.totalorder %s18, 1
      %p78 = por %p76, %p77
      %p79 = scmp.ne.s32.totalorder %s70, %s71
      %p80 = scmp.eq.s32.totalorder %s18, 0
      %p81 = por %p79, %p80
      %p82 = scmp.ne.s32.totalorder %s70, %s71
      %p83 = scmp.eq.s32.totalorder %s19, 1
      %p84 = por %p82, %p83
      %p86 = scmp.ne.s32.totalorder %s71, %s85
      %p87 = scmp.eq.s32.totalorder %s19, 0
      %p88 = por %p86, %p87
      %s89 = ssub.s32 %s13, %s20
      %p90 = scmp.eq.s32.totalorder %s89, 0
      %s92 = sadd.s32 %s91, 1
      %s93 = scalar_select %p90, %s91, %s92
      %p96 = pneg %p90
      %p97 = scmp.eq.s32.totalorder %s13, 1
      %p98 = por %p96, %p97
      %p99 = scmp.ne.s32.totalorder %s91, %s94
      %p100 = scmp.eq.s32.totalorder %s13, 0
      %p101 = por %p99, %p100
      %p102 = scmp.ne.s32.totalorder %s91, %s94
      %p103 = scmp.eq.s32.totalorder %s18, 1
      %p104 = por %p102, %p103
      %p105 = scmp.ne.s32.totalorder %s94, %s95
      %p106 = scmp.eq.s32.totalorder %s18, 0
      %p107 = por %p105, %p106
      %p108 = scmp.ne.s32.totalorder %s94, %s95
      %p109 = scmp.eq.s32.totalorder %s19, 1
      %p110 = por %p108, %p109
      %p112 = scmp.ne.s32.totalorder %s95, %s111
      %p113 = scmp.eq.s32.totalorder %s19, 0
      %p114 = por %p112, %p113
      %p115 = scmp.le.s32.totalorder 1, %s13
      %p116 = scmp.lt.s32.totalorder %s13, 3
      %p117 = pnand %p115, %p116
      %p118 = pneg %p117
      // Predicated region
      $region9: #{actor_forward.1} parent=5 // pred_check
        _
      $region10: #{actor_forward.1} parent=5 // pred_check_branch
        %120 = sbr.rel (%p117) target = $region12
      $region11: #{actor_forward.1} parent=5 // pred_region
        %s121 = ssub.s32 %s13, 1
        // Predicated region
        $region13: #{actor_forward.1} parent=11 // pred_check
          %p122 = pneg %p60
        $region14: #{actor_forward.1} parent=11 // pred_check_branch
          %124 = sbr.rel (%p122) target = $region16
        $region15: #{actor_forward.1} parent=11 // pred_region
          _
        $region16: #{actor_forward.1} parent=11 // pred_fallthru
          _
        // Predicated region
        $region17: #{actor_forward.1} parent=11 // pred_check
          %p125 = pneg %p81
        $region18: #{actor_forward.1} parent=11 // pred_check_branch
          %127 = sbr.rel (%p125) target = $region20
        $region19: #{actor_forward.1} parent=11 // pred_region
          %s129 = ssub.s32 8192, 8192
          %130 = vsyncadd [#allocation3], %s129
          %s131 = sshll.u32 [#allocation2], 4
          %s132 = int_to_ptr.vmem [resolvable:$true] %s131
          %137 = dma.hbm_to_vmem [thread:$0]  %s2, 8192, %s132, [#allocation3], 128, 128, 8
        $region20: #{actor_forward.1} parent=11 // pred_fallthru
          _
      $region12: #{actor_forward.1} parent=5 // pred_fallthru
        _
      %p138 = scmp.lt.s32.totalorder %s13, 2
      // Predicated region
      $region21: #{actor_forward.1} parent=5 // pred_check
        %p139 = pneg %p138
      $region22: #{actor_forward.1} parent=5 // pred_check_branch
        %141 = sbr.rel (%p139) target = $region24
      $region23: #{actor_forward.1} parent=5 // pred_region
        // Predicated region
        $region25: #{actor_forward.1} parent=23 // pred_check
          %p142 = pneg %p33
        $region26: #{actor_forward.1} parent=23 // pred_check_branch
          %144 = sbr.rel (%p142) target = $region28
        $region27: #{actor_forward.1} parent=23 // pred_region
          %s145 = smul.u32 2, %s13
          %p146 = scmp.lt.s32.totalorder %s145, 3
          %s147 = scalar_select %p146, %s145, 3
          %s148 = smul.addr %s147, 8
          %s149 = scalar_lea.vmem %s0, %s148
          %s150 = smul.u32 2, %s13
        $region28: #{actor_forward.1} parent=23 // pred_fallthru
          _
      $region24: #{actor_forward.1} parent=5 // pred_fallthru
        _
      %p151 = scmp.le.s32.totalorder 1, %s13
      %p152 = scmp.lt.s32.totalorder %s13, 3
      %p153 = pnand %p151, %p152
      %p154 = pneg %p153
      // Predicated region
      $region29: #{actor_forward.1} parent=5 // pred_check
        _
      $region30: #{actor_forward.1} parent=5 // pred_check_branch
        %156 = sbr.rel (%p153) target = $region32
      $region31: #{actor_forward.1} parent=5 // pred_region
        %s157 = ssub.s32 %s13, 1
        // Predicated region
        $region33: #{actor_forward.1} parent=31 // pred_check
          %p158 = pneg %p81
        $region34: #{actor_forward.1} parent=31 // pred_check_branch
          %160 = sbr.rel (%p158) target = $region36
        $region35: #{actor_forward.1} parent=31 // pred_region
          %161 = dma.done [#allocation3], 8192
        $region36: #{actor_forward.1} parent=31 // pred_fallthru
          _
        %s162 = smul.u32 2, %s18
        %p163 = scmp.lt.s32.totalorder %s162, 3
        %s164 = scalar_select %p163, %s162, 3
        %s165 = smul.addr %s164, 8
        %s166 = scalar_lea.vmem %s0, %s165
        %p167 = pneg %p39
        %p168 = pneg %p36
        %p169 = pneg %p60
        %p170 = pneg %p57
        %p171 = pneg %p81
        %p172 = pneg %p78
        %p173 = pneg %p107
        %p174 = pneg %p104
        %s175 = sand.u32 %s94, 1
        %s176 = scalar_lea.sflag [#allocation4], %s175
        %s177 = sand.u32 %s94, 1
        %s178 = smul.addr %s177, 16
        %s179 = scalar_lea.vmem [#allocation5], %s178
        %s180 = smul.u32 2, %s18
        %p181 = scmp.lt.s32.totalorder %s180, 3
        %s182 = scalar_select %p181, %s180, 3
        %s183 = smul.addr %s182, 8
        %s184 = scalar_lea.vmem %s0, %s183
        %s185 = smul.u32 2, %s18
        %s186 = smul.u32 2, %s18
        %v187 = vld [vmem:[%s184] sm:$0xff]
        %v188 = vld [vmem:[%s184 + $0x8] sm:$0xff]
        %v189 = vld [vmem:[%s1] sm:$0x1]
        %v190 = vld [vmem:[%s1 + $0x1] sm:$0x1]
        %v191 = vrot.slane %v187, 4
        %v192 = vadd.f32 %v187, %v191
        %v193 = vrot.slane %v192, 2
        %v194 = vadd.f32 %v192, %v193
        %v195 = vrot.slane %v194, 1
        %v196 = vadd.f32 %v194, %v195
        %v197 = vrot.slane %v188, 4
        %v198 = vadd.f32 %v188, %v197
        %v199 = vrot.slane %v198, 2
        %v200 = vadd.f32 %v198, %v199
        %v201 = vrot.slane %v200, 1
        %v202 = vadd.f32 %v200, %v201
        %v203 = vrcp.pop 8.0
        %v204 = vmul.f32 %v196, %v203
        %v205 = vmul.f32 %v202, %v203
        %v206 = vsub.f32 %v187, %v204
        %v207 = vsub.f32 %v188, %v205
        %v208 = vmul.f32 %v206, %v206
        %v209 = vmul.f32 %v207, %v207
        %v210 = vrot.slane %v208, 4
        %v211 = vadd.f32 %v208, %v210
        %v212 = vrot.slane %v211, 2
        %v213 = vadd.f32 %v211, %v212
        %v214 = vrot.slane %v213, 1
        %v215 = vadd.f32 %v213, %v214
        %v216 = vrot.slane %v209, 4
        %v217 = vadd.f32 %v209, %v216
        %v218 = vrot.slane %v217, 2
        %v219 = vadd.f32 %v217, %v218
        %v220 = vrot.slane %v219, 1
        %v221 = vadd.f32 %v219, %v220
        %v222 = vmul.f32 %v215, %v203
        %v223 = vmul.f32 %v221, %v203
        %v224 = vadd.f32 %v222, 1e-05
        %v225 = vadd.f32 %v223, 1e-05
        %v226 = vrsqrt.pop %v224
        %v227 = vrsqrt.pop %v225
        %v228 = vmul.f32 %v189, %v226
        %v229 = vmul.f32 %v189, %v227
        %v230 = vlaneseq
        %v231 = vshrl.u32 %v230, 7
        %v232 = vsub.s32 0, %v231
        %v233 = vrot.slane %v228, %v232
        %v234 = vlaneseq
        %v235 = vshrl.u32 %v234, 7
        %v236 = vsub.s32 0, %v235
        %v237 = vrot.slane %v229, %v236
        %v238 = vmul.f32 %v206, %v233
        %v239 = vmul.f32 %v207, %v237
        %v240 = vlaneseq
        %v241 = vshrl.u32 %v240, 7
        %v242 = vsub.s32 0, %v241
        %v243 = vrot.slane %v190, %v242
        %v244 = vadd.f32 %v238, %v243
        %v245 = vadd.f32 %v239, %v243
        %v246 = vld [vmem:[#allocation2] sm:$0xff]
        %v247 = vld [vmem:[#allocation2 + $0x8] sm:$0xff]
        %v248 = vld [vmem:[#allocation2 + $0x10] sm:$0xff]
        %v249 = vld [vmem:[#allocation2 + $0x18] sm:$0xff]
        %v250 = vld [vmem:[#allocation2 + $0x20] sm:$0xff]
        %v251 = vld [vmem:[#allocation2 + $0x28] sm:$0xff]
        %v252 = vld [vmem:[#allocation2 + $0x30] sm:$0xff]
        %v253 = vld [vmem:[#allocation2 + $0x38] sm:$0xff]
        %v254 = vld [vmem:[#allocation2 + $0x40] sm:$0xff]
        %v255 = vld [vmem:[#allocation2 + $0x48] sm:$0xff]
        %v256 = vld [vmem:[#allocation2 + $0x50] sm:$0xff]
        %v257 = vld [vmem:[#allocation2 + $0x58] sm:$0xff]
        %v258 = vld [vmem:[#allocation2 + $0x60] sm:$0xff]
        %v259 = vld [vmem:[#allocation2 + $0x68] sm:$0xff]
        %v260 = vld [vmem:[#allocation2 + $0x70] sm:$0xff]
        %v261 = vld [vmem:[#allocation2 + $0x78] sm:$0xff]
        %v262 = vld [vmem:[%s1 + $0x2] sm:$0x1]
        %v263 = vlaneseq
        %v264 = vshrl.u32 %v263, 7
        %v265 = vsub.s32 0, %v264
        %v266 = vrot.slane %v262, %v265
        %267 = vmatprep.subr.mxu0 0.0
        %268 = vmatpush1.msra.mxu0 %v246
        %269 = vmatprep.subr.mxu0 0.0
        %270 = vmatpush1.msra.mxu0 %v247
        %271 = vmatprep.subr.mxu0 0.0
        %272 = vmatpush1.msra.mxu0 %v248
        %273 = vmatprep.subr.mxu0 0.0
        %274 = vmatpush1.msra.mxu0 %v249
        %275 = vmatprep.subr.mxu0 0.0
        %276 = vmatpush1.msra.mxu0 %v250
        %277 = vmatprep.subr.mxu0 0.0
        %278 = vmatpush1.msra.mxu0 %v251
        %279 = vmatprep.subr.mxu0 0.0
        %280 = vmatpush1.msra.mxu0 %v252
        %281 = vmatprep.subr.mxu0 0.0
        %282 = vmatpush1.msra.mxu0 %v253
        %283 = vmatprep.subr.mxu0 0.0
        %284 = vmatpush1.msra.mxu0 %v254
        %285 = vmatprep.subr.mxu0 0.0
        %286 = vmatpush1.msra.mxu0 %v255
        %287 = vmatprep.subr.mxu0 0.0
        %288 = vmatpush1.msra.mxu0 %v256
        %289 = vmatprep.subr.mxu0 0.0
        %290 = vmatpush1.msra.mxu0 %v257
        %291 = vmatprep.subr.mxu0 0.0
        %292 = vmatpush1.msra.mxu0 %v258
        %293 = vmatprep.subr.mxu0 0.0
        %294 = vmatpush1.msra.mxu0 %v259
        %295 = vmatprep.subr.mxu0 0.0
        %296 = vmatpush1.msra.mxu0 %v260
        %297 = vmatprep.subr.mxu0 0.0
        %298 = vmatpush1.msra.mxu0 %v261
        %299 = vmatprep.subr.mxu0 0.0
        %300 = vmatpush1.msra.mxu0 0.0
        %301 = vmatprep.subr.mxu0 0.0
        %302 = vmatpush1.msra.mxu0 0.0
        %303 = vmatprep.subr.mxu0 0.0
        %304 = vmatpush1.msra.mxu0 0.0
        %305 = vmatprep.subr.mxu0 0.0
        %306 = vmatpush1.msra.mxu0 0.0
        %307 = vmatprep.subr.mxu0 0.0
        %308 = vmatpush1.msra.mxu0 0.0
        %309 = vmatprep.subr.mxu0 0.0
        %310 = vmatpush1.msra.mxu0 0.0
        %311 = vmatprep.subr.mxu0 0.0
        %312 = vmatpush1.msra.mxu0 0.0
        %313 = vmatprep.subr.mxu0 0.0
        %314 = vmatpush1.msra.mxu0 0.0
        %315 = vmatprep.subr.mxu0 0.0
        %316 = vmatpush1.msra.mxu0 0.0
        %317 = vmatprep.subr.mxu0 0.0
        %318 = vmatpush1.msra.mxu0 0.0
        %319 = vmatprep.subr.mxu0 0.0
        %320 = vmatpush1.msra.mxu0 0.0
        %321 = vmatprep.subr.mxu0 0.0
        %322 = vmatpush1.msra.mxu0 0.0
        %323 = vmatprep.subr.mxu0 0.0
        %324 = vmatpush1.msra.mxu0 0.0
        %325 = vmatprep.subr.mxu0 0.0
        %326 = vmatpush1.msra.mxu0 0.0
        %327 = vmatprep.subr.mxu0 0.0
        %328 = vmatpush1.msra.mxu0 0.0
        %329 = vmatprep.subr.mxu0 0.0
        %330 = vmatpush1.msra.mxu0 0.0
        %331 = vmatprep.mubr.f32.mxu0 0.0
        %332 = vmatmul.mubr.f32.gmra.mrb[0].mxu0 %v244
        %v333 = vpop.f32.mrb[0].mxu0
        %v334 = vadd.f32 %v266, %v333
        %v335 = vpop.f32.mrb[0].mxu0
        %336 = vmatprep.mubr.f32.mxu0 0.0
        %337 = vmatmul.mubr.f32.gmra.mrb[0].mxu0 %v245
        %v338 = vpop.f32.mrb[0].mxu0
        %v339 = vadd.f32 %v266, %v338
        %v340 = vpop.f32.mrb[0].mxu0
        %341 = vdwg.mxu0
        %v342 = vmax.f32 %v334, 0.0
        %v343 = vmax.f32 %v339, 0.0
        %v344 = vld [vmem:[%s1 + $0x3] sm:$0x1]
        %v345 = vld [vmem:[%s1 + $0x4] sm:$0x1]
        %v346 = vrot.slane %v342, 4
        %v347 = vadd.f32 %v342, %v346
        %v348 = vrot.slane %v347, 2
        %v349 = vadd.f32 %v347, %v348
        %v350 = vrot.slane %v349, 1
        %v351 = vadd.f32 %v349, %v350
        %v352 = vrot.slane %v343, 4
        %v353 = vadd.f32 %v343, %v352
        %v354 = vrot.slane %v353, 2
        %v355 = vadd.f32 %v353, %v354
        %v356 = vrot.slane %v355, 1
        %v357 = vadd.f32 %v355, %v356
        %v358 = vmul.f32 %v351, %v203
        %v359 = vmul.f32 %v357, %v203
        %v360 = vsub.f32 %v342, %v358
        %v361 = vsub.f32 %v343, %v359
        %v362 = vmul.f32 %v360, %v360
        %v363 = vmul.f32 %v361, %v361
        %v364 = vrot.slane %v362, 4
        %v365 = vadd.f32 %v362, %v364
        %v366 = vrot.slane %v365, 2
        %v367 = vadd.f32 %v365, %v366
        %v368 = vrot.slane %v367, 1
        %v369 = vadd.f32 %v367, %v368
        %v370 = vrot.slane %v363, 4
        %v371 = vadd.f32 %v363, %v370
        %v372 = vrot.slane %v371, 2
        %v373 = vadd.f32 %v371, %v372
        %v374 = vrot.slane %v373, 1
        %v375 = vadd.f32 %v373, %v374
        %v376 = vmul.f32 %v369, %v203
        %v377 = vmul.f32 %v375, %v203
        %v378 = vadd.f32 %v376, 1e-05
        %v379 = vadd.f32 %v377, 1e-05
        %v380 = vrsqrt.pop %v378
        %v381 = vrsqrt.pop %v379
        %v382 = vmul.f32 %v344, %v380
        %v383 = vmul.f32 %v344, %v381
        %v384 = vlaneseq
        %v385 = vshrl.u32 %v384, 7
        %v386 = vsub.s32 0, %v385
        %v387 = vrot.slane %v382, %v386
        %v388 = vlaneseq
        %v389 = vshrl.u32 %v388, 7
        %v390 = vsub.s32 0, %v389
        %v391 = vrot.slane %v383, %v390
        %v392 = vmul.f32 %v360, %v387
        %v393 = vmul.f32 %v361, %v391
        %v394 = vlaneseq
        %v395 = vshrl.u32 %v394, 7
        %v396 = vsub.s32 0, %v395
        %v397 = vrot.slane %v345, %v396
        %v398 = vadd.f32 %v392, %v397
        %v399 = vadd.f32 %v393, %v397
        %v400 = vld [vmem:[#allocation2 + $0x80] sm:$0xff]
        %v401 = vld [vmem:[#allocation2 + $0x88] sm:$0xff]
        %v402 = vld [vmem:[#allocation2 + $0x90] sm:$0xff]
        %v403 = vld [vmem:[#allocation2 + $0x98] sm:$0xff]
        %v404 = vld [vmem:[#allocation2 + $0xa0] sm:$0xff]
        %v405 = vld [vmem:[#allocation2 + $0xa8] sm:$0xff]
        %v406 = vld [vmem:[#allocation2 + $0xb0] sm:$0xff]
        %v407 = vld [vmem:[#allocation2 + $0xb8] sm:$0xff]
        %v408 = vld [vmem:[#allocation2 + $0xc0] sm:$0xff]
        %v409 = vld [vmem:[#allocation2 + $0xc8] sm:$0xff]
        %v410 = vld [vmem:[#allocation2 + $0xd0] sm:$0xff]
        %v411 = vld [vmem:[#allocation2 + $0xd8] sm:$0xff]
        %v412 = vld [vmem:[#allocation2 + $0xe0] sm:$0xff]
        %v413 = vld [vmem:[#allocation2 + $0xe8] sm:$0xff]
        %v414 = vld [vmem:[#allocation2 + $0xf0] sm:$0xff]
        %v415 = vld [vmem:[#allocation2 + $0xf8] sm:$0xff]
        %v416 = vld [vmem:[%s1 + $0x5] sm:$0x1]
        %v417 = vlaneseq
        %v418 = vshrl.u32 %v417, 7
        %v419 = vsub.s32 0, %v418
        %v420 = vrot.slane %v416, %v419
        %421 = vmatprep.subr.mxu0 0.0
        %422 = vmatpush1.msra.mxu0 %v400
        %423 = vmatprep.subr.mxu0 0.0
        %424 = vmatpush1.msra.mxu0 %v401
        %425 = vmatprep.subr.mxu0 0.0
        %426 = vmatpush1.msra.mxu0 %v402
        %427 = vmatprep.subr.mxu0 0.0
        %428 = vmatpush1.msra.mxu0 %v403
        %429 = vmatprep.subr.mxu0 0.0
        %430 = vmatpush1.msra.mxu0 %v404
        %431 = vmatprep.subr.mxu0 0.0
        %432 = vmatpush1.msra.mxu0 %v405
        %433 = vmatprep.subr.mxu0 0.0
        %434 = vmatpush1.msra.mxu0 %v406
        %435 = vmatprep.subr.mxu0 0.0
        %436 = vmatpush1.msra.mxu0 %v407
        %437 = vmatprep.subr.mxu0 0.0
        %438 = vmatpush1.msra.mxu0 %v408
        %439 = vmatprep.subr.mxu0 0.0
        %440 = vmatpush1.msra.mxu0 %v409
        %441 = vmatprep.subr.mxu0 0.0
        %442 = vmatpush1.msra.mxu0 %v410
        %443 = vmatprep.subr.mxu0 0.0
        %444 = vmatpush1.msra.mxu0 %v411
        %445 = vmatprep.subr.mxu0 0.0
        %446 = vmatpush1.msra.mxu0 %v412
        %447 = vmatprep.subr.mxu0 0.0
        %448 = vmatpush1.msra.mxu0 %v413
        %449 = vmatprep.subr.mxu0 0.0
        %450 = vmatpush1.msra.mxu0 %v414
        %451 = vmatprep.subr.mxu0 0.0
        %452 = vmatpush1.msra.mxu0 %v415
        %453 = vmatprep.subr.mxu0 0.0
        %454 = vmatpush1.msra.mxu0 0.0
        %455 = vmatprep.subr.mxu0 0.0
        %456 = vmatpush1.msra.mxu0 0.0
        %457 = vmatprep.subr.mxu0 0.0
        %458 = vmatpush1.msra.mxu0 0.0
        %459 = vmatprep.subr.mxu0 0.0
        %460 = vmatpush1.msra.mxu0 0.0
        %461 = vmatprep.subr.mxu0 0.0
        %462 = vmatpush1.msra.mxu0 0.0
        %463 = vmatprep.subr.mxu0 0.0
        %464 = vmatpush1.msra.mxu0 0.0
        %465 = vmatprep.subr.mxu0 0.0
        %466 = vmatpush1.msra.mxu0 0.0
        %467 = vmatprep.subr.mxu0 0.0
        %468 = vmatpush1.msra.mxu0 0.0
        %469 = vmatprep.subr.mxu0 0.0
        %470 = vmatpush1.msra.mxu0 0.0
        %471 = vmatprep.subr.mxu0 0.0
        %472 = vmatpush1.msra.mxu0 0.0
        %473 = vmatprep.subr.mxu0 0.0
        %474 = vmatpush1.msra.mxu0 0.0
        %475 = vmatprep.subr.mxu0 0.0
        %476 = vmatpush1.msra.mxu0 0.0
        %477 = vmatprep.subr.mxu0 0.0
        %478 = vmatpush1.msra.mxu0 0.0
        %479 = vmatprep.subr.mxu0 0.0
        %480 = vmatpush1.msra.mxu0 0.0
        %481 = vmatprep.subr.mxu0 0.0
        %482 = vmatpush1.msra.mxu0 0.0
        %483 = vmatprep.subr.mxu0 0.0
        %484 = vmatpush1.msra.mxu0 0.0
        %485 = vmatprep.mubr.f32.mxu0 0.0
        %486 = vmatmul.mubr.f32.gmra.mrb[0].mxu0 %v398
        %v487 = vpop.f32.mrb[0].mxu0
        %v488 = vadd.f32 %v420, %v487
        %v489 = vpop.f32.mrb[0].mxu0
        %490 = vmatprep.mubr.f32.mxu0 0.0
        %491 = vmatmul.mubr.f32.gmra.mrb[0].mxu0 %v399
        %v492 = vpop.f32.mrb[0].mxu0
        %v493 = vadd.f32 %v420, %v492
        %v494 = vpop.f32.mrb[0].mxu0
        %495 = vdwg.mxu0
        %v496 = vmax.f32 %v488, 0.0
        %v497 = vmax.f32 %v493, 0.0
        %v498 = vld [vmem:[%s1 + $0x6] sm:$0x1]
        %v499 = vld [vmem:[%s1 + $0x7] sm:$0x1]
        %v500 = vrot.slane %v496, 4
        %v501 = vadd.f32 %v496, %v500
        %v502 = vrot.slane %v501, 2
        %v503 = vadd.f32 %v501, %v502
        %v504 = vrot.slane %v503, 1
        %v505 = vadd.f32 %v503, %v504
        %v506 = vrot.slane %v497, 4
        %v507 = vadd.f32 %v497, %v506
        %v508 = vrot.slane %v507, 2
        %v509 = vadd.f32 %v507, %v508
        %v510 = vrot.slane %v509, 1
        %v511 = vadd.f32 %v509, %v510
        %v512 = vmul.f32 %v505, %v203
        %v513 = vmul.f32 %v511, %v203
        %v514 = vsub.f32 %v496, %v512
        %v515 = vsub.f32 %v497, %v513
        %v516 = vmul.f32 %v514, %v514
        %v517 = vmul.f32 %v515, %v515
        %v518 = vrot.slane %v516, 4
        %v519 = vadd.f32 %v516, %v518
        %v520 = vrot.slane %v519, 2
        %v521 = vadd.f32 %v519, %v520
        %v522 = vrot.slane %v521, 1
        %v523 = vadd.f32 %v521, %v522
        %v524 = vrot.slane %v517, 4
        %v525 = vadd.f32 %v517, %v524
        %v526 = vrot.slane %v525, 2
        %v527 = vadd.f32 %v525, %v526
        %v528 = vrot.slane %v527, 1
        %v529 = vadd.f32 %v527, %v528
        %v530 = vmul.f32 %v523, %v203
        %v531 = vmul.f32 %v529, %v203
        %v532 = vadd.f32 %v530, 1e-05
        %v533 = vadd.f32 %v531, 1e-05
        %v534 = vrsqrt.pop %v532
        %v535 = vrsqrt.pop %v533
        %v536 = vmul.f32 %v498, %v534
        %v537 = vmul.f32 %v498, %v535
        %v538 = vlaneseq
        %v539 = vshrl.u32 %v538, 7
        %v540 = vsub.s32 0, %v539
        %v541 = vrot.slane %v536, %v540
        %v542 = vlaneseq
        %v543 = vshrl.u32 %v542, 7
        %v544 = vsub.s32 0, %v543
        %v545 = vrot.slane %v537, %v544
        %v546 = vmul.f32 %v514, %v541
        %v547 = vmul.f32 %v515, %v545
        %v548 = vlaneseq
        %v549 = vshrl.u32 %v548, 7
        %v550 = vsub.s32 0, %v549
        %v551 = vrot.slane %v499, %v550
        %v552 = vadd.f32 %v546, %v551
        %v553 = vadd.f32 %v547, %v551
        %v554 = vld [vmem:[#allocation2 + $0x100] sm:$0xff]
        %v555 = vld [vmem:[#allocation2 + $0x108] sm:$0xff]
        %v556 = vld [vmem:[#allocation2 + $0x110] sm:$0xff]
        %v557 = vld [vmem:[#allocation2 + $0x118] sm:$0xff]
        %v558 = vld [vmem:[#allocation2 + $0x120] sm:$0xff]
        %v559 = vld [vmem:[#allocation2 + $0x128] sm:$0xff]
        %v560 = vld [vmem:[#allocation2 + $0x130] sm:$0xff]
        %v561 = vld [vmem:[#allocation2 + $0x138] sm:$0xff]
        %v562 = vld [vmem:[#allocation2 + $0x140] sm:$0xff]
        %v563 = vld [vmem:[#allocation2 + $0x148] sm:$0xff]
        %v564 = vld [vmem:[#allocation2 + $0x150] sm:$0xff]
        %v565 = vld [vmem:[#allocation2 + $0x158] sm:$0xff]
        %v566 = vld [vmem:[#allocation2 + $0x160] sm:$0xff]
        %v567 = vld [vmem:[#allocation2 + $0x168] sm:$0xff]
        %v568 = vld [vmem:[#allocation2 + $0x170] sm:$0xff]
        %v569 = vld [vmem:[#allocation2 + $0x178] sm:$0xff]
        %v570 = vld [vmem:[%s1 + $0x8] sm:$0x1]
        %v571 = vlaneseq
        %v572 = vshrl.u32 %v571, 7
        %v573 = vsub.s32 0, %v572
        %v574 = vrot.slane %v570, %v573
        %575 = vmatprep.subr.mxu0 0.0
        %576 = vmatpush1.msra.mxu0 %v554
        %577 = vmatprep.subr.mxu0 0.0
        %578 = vmatpush1.msra.mxu0 %v555
        %579 = vmatprep.subr.mxu0 0.0
        %580 = vmatpush1.msra.mxu0 %v556
        %581 = vmatprep.subr.mxu0 0.0
        %582 = vmatpush1.msra.mxu0 %v557
        %583 = vmatprep.subr.mxu0 0.0
        %584 = vmatpush1.msra.mxu0 %v558
        %585 = vmatprep.subr.mxu0 0.0
        %586 = vmatpush1.msra.mxu0 %v559
        %587 = vmatprep.subr.mxu0 0.0
        %588 = vmatpush1.msra.mxu0 %v560
        %589 = vmatprep.subr.mxu0 0.0
        %590 = vmatpush1.msra.mxu0 %v561
        %591 = vmatprep.subr.mxu0 0.0
        %592 = vmatpush1.msra.mxu0 %v562
        %593 = vmatprep.subr.mxu0 0.0
        %594 = vmatpush1.msra.mxu0 %v563
        %595 = vmatprep.subr.mxu0 0.0
        %596 = vmatpush1.msra.mxu0 %v564
        %597 = vmatprep.subr.mxu0 0.0
        %598 = vmatpush1.msra.mxu0 %v565
        %599 = vmatprep.subr.mxu0 0.0
        %600 = vmatpush1.msra.mxu0 %v566
        %601 = vmatprep.subr.mxu0 0.0
        %602 = vmatpush1.msra.mxu0 %v567
        %603 = vmatprep.subr.mxu0 0.0
        %604 = vmatpush1.msra.mxu0 %v568
        %605 = vmatprep.subr.mxu0 0.0
        %606 = vmatpush1.msra.mxu0 %v569
        %607 = vmatprep.subr.mxu0 0.0
        %608 = vmatpush1.msra.mxu0 0.0
        %609 = vmatprep.subr.mxu0 0.0
        %610 = vmatpush1.msra.mxu0 0.0
        %611 = vmatprep.subr.mxu0 0.0
        %612 = vmatpush1.msra.mxu0 0.0
        %613 = vmatprep.subr.mxu0 0.0
        %614 = vmatpush1.msra.mxu0 0.0
        %615 = vmatprep.subr.mxu0 0.0
        %616 = vmatpush1.msra.mxu0 0.0
        %617 = vmatprep.subr.mxu0 0.0
        %618 = vmatpush1.msra.mxu0 0.0
        %619 = vmatprep.subr.mxu0 0.0
        %620 = vmatpush1.msra.mxu0 0.0
        %621 = vmatprep.subr.mxu0 0.0
        %622 = vmatpush1.msra.mxu0 0.0
        %623 = vmatprep.subr.mxu0 0.0
        %624 = vmatpush1.msra.mxu0 0.0
        %625 = vmatprep.subr.mxu0 0.0
        %626 = vmatpush1.msra.mxu0 0.0
        %627 = vmatprep.subr.mxu0 0.0
        %628 = vmatpush1.msra.mxu0 0.0
        %629 = vmatprep.subr.mxu0 0.0
        %630 = vmatpush1.msra.mxu0 0.0
        %631 = vmatprep.subr.mxu0 0.0
        %632 = vmatpush1.msra.mxu0 0.0
        %633 = vmatprep.subr.mxu0 0.0
        %634 = vmatpush1.msra.mxu0 0.0
        %635 = vmatprep.subr.mxu0 0.0
        %636 = vmatpush1.msra.mxu0 0.0
        %637 = vmatprep.subr.mxu0 0.0
        %638 = vmatpush1.msra.mxu0 0.0
        %639 = vmatprep.mubr.f32.mxu0 0.0
        %640 = vmatmul.mubr.f32.gmra.mrb[0].mxu0 %v552
        %v641 = vpop.f32.mrb[0].mxu0
        %v642 = vadd.f32 %v574, %v641
        %v643 = vpop.f32.mrb[0].mxu0
        %644 = vmatprep.mubr.f32.mxu0 0.0
        %645 = vmatmul.mubr.f32.gmra.mrb[0].mxu0 %v553
        %v646 = vpop.f32.mrb[0].mxu0
        %v647 = vadd.f32 %v574, %v646
        %v648 = vpop.f32.mrb[0].mxu0
        %649 = vdwg.mxu0
        %v650 = vmax.f32 %v642, 0.0
        %v651 = vmax.f32 %v647, 0.0
        %v652 = vld [vmem:[%s1 + $0x9] sm:$0x1]
        %v653 = vld [vmem:[%s1 + $0xa] sm:$0x1]
        %v654 = vrot.slane %v650, 4
        %v655 = vadd.f32 %v650, %v654
        %v656 = vrot.slane %v655, 2
        %v657 = vadd.f32 %v655, %v656
        %v658 = vrot.slane %v657, 1
        %v659 = vadd.f32 %v657, %v658
        %v660 = vrot.slane %v651, 4
        %v661 = vadd.f32 %v651, %v660
        %v662 = vrot.slane %v661, 2
        %v663 = vadd.f32 %v661, %v662
        %v664 = vrot.slane %v663, 1
        %v665 = vadd.f32 %v663, %v664
        %v666 = vmul.f32 %v659, %v203
        %v667 = vmul.f32 %v665, %v203
        %v668 = vsub.f32 %v650, %v666
        %v669 = vsub.f32 %v651, %v667
        %v670 = vmul.f32 %v668, %v668
        %v671 = vmul.f32 %v669, %v669
        %v672 = vrot.slane %v670, 4
        %v673 = vadd.f32 %v670, %v672
        %v674 = vrot.slane %v673, 2
        %v675 = vadd.f32 %v673, %v674
        %v676 = vrot.slane %v675, 1
        %v677 = vadd.f32 %v675, %v676
        %v678 = vrot.slane %v671, 4
        %v679 = vadd.f32 %v671, %v678
        %v680 = vrot.slane %v679, 2
        %v681 = vadd.f32 %v679, %v680
        %v682 = vrot.slane %v681, 1
        %v683 = vadd.f32 %v681, %v682
        %v684 = vmul.f32 %v677, %v203
        %v685 = vmul.f32 %v683, %v203
        %v686 = vadd.f32 %v684, 1e-05
        %v687 = vadd.f32 %v685, 1e-05
        %v688 = vrsqrt.pop %v686
        %v689 = vrsqrt.pop %v687
        %v690 = vmul.f32 %v652, %v688
        %v691 = vmul.f32 %v652, %v689
        %v692 = vlaneseq
        %v693 = vshrl.u32 %v692, 7
        %v694 = vsub.s32 0, %v693
        %v695 = vrot.slane %v690, %v694
        %v696 = vlaneseq
        %v697 = vshrl.u32 %v696, 7
        %v698 = vsub.s32 0, %v697
        %v699 = vrot.slane %v691, %v698
        %v700 = vmul.f32 %v668, %v695
        %v701 = vmul.f32 %v669, %v699
        %v702 = vlaneseq
        %v703 = vshrl.u32 %v702, 7
        %v704 = vsub.s32 0, %v703
        %v705 = vrot.slane %v653, %v704
        %v706 = vadd.f32 %v700, %v705
        %v707 = vadd.f32 %v701, %v705
        %v708 = vld [vmem:[#allocation2 + $0x180] sm:$0xff]
        %v709 = vld [vmem:[#allocation2 + $0x188] sm:$0xff]
        %v710 = vld [vmem:[#allocation2 + $0x190] sm:$0xff]
        %v711 = vld [vmem:[#allocation2 + $0x198] sm:$0xff]
        %v712 = vld [vmem:[#allocation2 + $0x1a0] sm:$0xff]
        %v713 = vld [vmem:[#allocation2 + $0x1a8] sm:$0xff]
        %v714 = vld [vmem:[#allocation2 + $0x1b0] sm:$0xff]
        %v715 = vld [vmem:[#allocation2 + $0x1b8] sm:$0xff]
        %v716 = vld [vmem:[#allocation2 + $0x1c0] sm:$0xff]
        %v717 = vld [vmem:[#allocation2 + $0x1c8] sm:$0xff]
        %v718 = vld [vmem:[#allocation2 + $0x1d0] sm:$0xff]
        %v719 = vld [vmem:[#allocation2 + $0x1d8] sm:$0xff]
        %v720 = vld [vmem:[#allocation2 + $0x1e0] sm:$0xff]
        %v721 = vld [vmem:[#allocation2 + $0x1e8] sm:$0xff]
        %v722 = vld [vmem:[#allocation2 + $0x1f0] sm:$0xff]
        %v723 = vld [vmem:[#allocation2 + $0x1f8] sm:$0xff]
        %v724 = vld [vmem:[%s1 + $0xb] sm:$0x1]
        %v725 = vlaneseq
        %v726 = vshrl.u32 %v725, 7
        %v727 = vsub.s32 0, %v726
        %v728 = vrot.slane %v724, %v727
        %729 = vmatprep.subr.mxu0 0.0
        %730 = vmatpush1.msra.mxu0 %v708
        %731 = vmatprep.subr.mxu0 0.0
        %732 = vmatpush1.msra.mxu0 %v709
        %733 = vmatprep.subr.mxu0 0.0
        %734 = vmatpush1.msra.mxu0 %v710
        %735 = vmatprep.subr.mxu0 0.0
        %736 = vmatpush1.msra.mxu0 %v711
        %737 = vmatprep.subr.mxu0 0.0
        %738 = vmatpush1.msra.mxu0 %v712
        %739 = vmatprep.subr.mxu0 0.0
        %740 = vmatpush1.msra.mxu0 %v713
        %741 = vmatprep.subr.mxu0 0.0
        %742 = vmatpush1.msra.mxu0 %v714
        %743 = vmatprep.subr.mxu0 0.0
        %744 = vmatpush1.msra.mxu0 %v715
        %745 = vmatprep.subr.mxu0 0.0
        %746 = vmatpush1.msra.mxu0 %v716
        %747 = vmatprep.subr.mxu0 0.0
        %748 = vmatpush1.msra.mxu0 %v717
        %749 = vmatprep.subr.mxu0 0.0
        %750 = vmatpush1.msra.mxu0 %v718
        %751 = vmatprep.subr.mxu0 0.0
        %752 = vmatpush1.msra.mxu0 %v719
        %753 = vmatprep.subr.mxu0 0.0
        %754 = vmatpush1.msra.mxu0 %v720
        %755 = vmatprep.subr.mxu0 0.0
        %756 = vmatpush1.msra.mxu0 %v721
        %757 = vmatprep.subr.mxu0 0.0
        %758 = vmatpush1.msra.mxu0 %v722
        %759 = vmatprep.subr.mxu0 0.0
        %760 = vmatpush1.msra.mxu0 %v723
        %761 = vmatprep.subr.mxu0 0.0
        %762 = vmatpush1.msra.mxu0 0.0
        %763 = vmatprep.subr.mxu0 0.0
        %764 = vmatpush1.msra.mxu0 0.0
        %765 = vmatprep.subr.mxu0 0.0
        %766 = vmatpush1.msra.mxu0 0.0
        %767 = vmatprep.subr.mxu0 0.0
        %768 = vmatpush1.msra.mxu0 0.0
        %769 = vmatprep.subr.mxu0 0.0
        %770 = vmatpush1.msra.mxu0 0.0
        %771 = vmatprep.subr.mxu0 0.0
        %772 = vmatpush1.msra.mxu0 0.0
        %773 = vmatprep.subr.mxu0 0.0
        %774 = vmatpush1.msra.mxu0 0.0
        %775 = vmatprep.subr.mxu0 0.0
        %776 = vmatpush1.msra.mxu0 0.0
        %777 = vmatprep.subr.mxu0 0.0
        %778 = vmatpush1.msra.mxu0 0.0
        %779 = vmatprep.subr.mxu0 0.0
        %780 = vmatpush1.msra.mxu0 0.0
        %781 = vmatprep.subr.mxu0 0.0
        %782 = vmatpush1.msra.mxu0 0.0
        %783 = vmatprep.subr.mxu0 0.0
        %784 = vmatpush1.msra.mxu0 0.0
        %785 = vmatprep.subr.mxu0 0.0
        %786 = vmatpush1.msra.mxu0 0.0
        %787 = vmatprep.subr.mxu0 0.0
        %788 = vmatpush1.msra.mxu0 0.0
        %789 = vmatprep.subr.mxu0 0.0
        %790 = vmatpush1.msra.mxu0 0.0
        %791 = vmatprep.subr.mxu0 0.0
        %792 = vmatpush1.msra.mxu0 0.0
        %793 = vmatprep.mubr.f32.mxu0 0.0
        %794 = vmatmul.mubr.f32.gmra.mrb[0].mxu0 %v706
        %v795 = vpop.f32.mrb[0].mxu0
        %v796 = vadd.f32 %v728, %v795
        %v797 = vpop.f32.mrb[0].mxu0
        %798 = vmatprep.mubr.f32.mxu0 0.0
        %799 = vmatmul.mubr.f32.gmra.mrb[0].mxu0 %v707
        %v800 = vpop.f32.mrb[0].mxu0
        %v801 = vadd.f32 %v728, %v800
        %v802 = vpop.f32.mrb[0].mxu0
        %803 = vdwg.mxu0
        %v804 = vtanh.pop %v796
        %v805 = vtanh.pop %v801
        %806 = vst [vmem:[%s179] sm:$0xff] %v804
        %807 = vst [vmem:[%s179 + $0x8] sm:$0xff] %v805
        %s808 = sand.u32 %s94, 1
        %s809 = scalar_lea.sflag [#allocation4], %s808
        %s810 = sand.u32 %s94, 1
        %s811 = smul.addr %s810, 16
        %s812 = scalar_lea.vmem [#allocation5], %s811
        // Predicated region
        $region37: #{actor_forward.1} parent=31 // pred_check
          %p813 = pneg %p104
        $region38: #{actor_forward.1} parent=31 // pred_check_branch
          %815 = sbr.rel (%p813) target = $region40
        $region39: #{actor_forward.1} parent=31 // pred_region
          %s816 = smul.u32 2, %s18
          %s818 = ssub.s32 256, 256
          %819 = vsyncadd %s809, %s818
          %s820 = smul.addr %s816, 128
          %s821 = scalar_lea.hbm %s3, %s820
          %s822 = sshll.u32 %s812, 4
          %s823 = int_to_ptr.vmem [resolvable:$true] %s822
          %828 = dma.vmem_to_hbm [thread:$0]  %s823, 256, %s821, %s809, 128, 128, 8
        $region40: #{actor_forward.1} parent=31 // pred_fallthru
          _
      $region32: #{actor_forward.1} parent=5 // pred_fallthru
        _
      %p829 = scmp.le.s32.totalorder 2, %s13
      // Predicated region
      $region41: #{actor_forward.1} parent=5 // pred_check
        %p830 = pneg %p829
      $region42: #{actor_forward.1} parent=5 // pred_check_branch
        %832 = sbr.rel (%p830) target = $region44
      $region43: #{actor_forward.1} parent=5 // pred_region
        %s833 = ssub.s32 %s13, 2
        // Predicated region
        $region45: #{actor_forward.1} parent=43 // pred_check
          %p834 = pneg %p110
        $region46: #{actor_forward.1} parent=43 // pred_check_branch
          %836 = sbr.rel (%p834) target = $region48
        $region47: #{actor_forward.1} parent=43 // pred_region
          %s837 = sand.u32 %s95, 1
          %s838 = scalar_lea.sflag [#allocation4], %s837
          %s839 = sand.u32 %s95, 1
          %s840 = smul.addr %s839, 16
          %s841 = scalar_lea.vmem [#allocation5], %s840
          %842 = dma.done %s838, 256
        $region48: #{actor_forward.1} parent=43 // pred_fallthru
          _
      $region44: #{actor_forward.1} parent=5 // pred_fallthru
        _
    $region6: #{actor_forward.1} parent=1 // loop_footer
      %s17 = sadd.s32 1, %s13
    $region7: #{actor_forward.1} parent=1 // loop_footer_branch
      %12 = sbr.rel target = $region3
    $region8: #{actor_forward.1} parent=1 // loop_exit
      _
    %843 = vsyncpa [#allocation3], 1
    %s844 = scalar_lea.sflag [#allocation3], 1
    %845 = vsyncpa %s844, 1
    %846 = vsyncpa [#allocation4], 1
    %s847 = scalar_lea.sflag [#allocation4], 1
    %848 = vsyncpa %s847, 1

</llo_original>
